<compile_context>
chip_gen: v7x
topology: tpu7x:2x2x1
jax: 0.10.0
libtpu: 0.0.40
codegen_flags: <defaults>
</compile_context>

<pallas_src>
import functools
import math

import jax
import jax.numpy as jnp
from jax import lax
from jax.experimental import pallas as pl
from jax.experimental.pallas import tpu as pltpu


def _round_up(x, m):
    return (x + m - 1) // m * m


# ------------------------------ Pallas kernel --------------------------------

def _conv_bn_act_kernel(*refs, row_offs, M, has_res, act):
    """out = act( sum_taps(x_rows @ w_tap) + shift [+ residual] ).

    x_ref : (1, R, Kc)       bf16  row-flattened, K-packed input (one image block)
    w_ref : (n_taps, Kc, tn) bf16  BN-scale-folded, K-packed weights (one Cout tile)
    b_ref : (1, tn)          f32   folded conv-bias + BN shift
    r_ref : (1, M, tn)       bf16  optional residual (only if has_res)
    o_ref : (1, M, tn)       bf16  output tile
    """
    if has_res:
        x_ref, w_ref, b_ref, r_ref, o_ref = refs
    else:
        x_ref, w_ref, b_ref, o_ref = refs
        r_ref = None

    acc = None
    for t, r0 in enumerate(row_offs):          # static unroll over height taps
        # r0 and M are multiples of 8 -> sublane-aligned, full-lane-width view
        patch = x_ref[0, r0:r0 + M, :]                              # (M, Kc)
        contrib = jnp.dot(patch, w_ref[t],
                          preferred_element_type=jnp.float32)      # MXU, f32 acc
        acc = contrib if acc is None else acc + contrib             # value accumulation

    out = acc + b_ref[...]                      # f32 epilogue
    if has_res:
        out = out + r_ref[0].astype(jnp.float32)
    if act:
        out = jnp.maximum(out, 0.0)
    o_ref[0] = out.astype(o_ref.dtype)          # bf16 store


@functools.lru_cache(maxsize=None)
def _build_conv_call(n_blk, R, Kc, cout_p, n_taps, row_offs, M, tn, has_res, act):
    n_co = cout_p // tn
    kernel = functools.partial(_conv_bn_act_kernel, row_offs=row_offs, M=M,
                               has_res=has_res, act=act)

    in_specs = [
        # input block stays resident across the Cout-tile axis (fetched once/block)
        pl.BlockSpec((1, R, Kc), lambda n, c: (n, 0, 0)),
        pl.BlockSpec((n_taps, Kc, tn), lambda n, c: (0, 0, c)),
        pl.BlockSpec((1, tn), lambda n, c: (0, c)),
    ]
    if has_res:
        in_specs.append(pl.BlockSpec((1, M, tn), lambda n, c: (n, 0, c)))
    out_spec = pl.BlockSpec((1, M, tn), lambda n, c: (n, 0, c))

    # VMEM budget: 2x (double buffer) per pipelined block + f32 epilogue headroom.
    x_blk = R * Kc * 2
    w_blk = n_taps * Kc * tn * 2
    o_blk = M * tn * 2
    r_blk = o_blk if has_res else 0
    need = 2 * (x_blk + w_blk + tn * 4 + o_blk + r_blk) + 2 * M * tn * 4
    try:
        phys = pltpu.get_tpu_info().vmem_capacity_bytes
    except Exception:
        phys = 64 << 20
    cap = (48 << 20) if phys <= (64 << 20) else (100 << 20)
    vmem_limit = int(min(max(need + (4 << 20), 32 << 20), cap))

    # advisory only (uses padded dims, slight over-report on zero lanes/cols)
    flops = 2 * n_blk * n_co * M * n_taps * Kc * tn
    bytes_accessed = n_blk * x_blk + n_blk * n_co * (w_blk + o_blk + r_blk + tn * 4)
    cost = pl.CostEstimate(flops=int(flops), transcendentals=0,
                           bytes_accessed=int(bytes_accessed))

    return pl.pallas_call(
        kernel,
        grid=(n_blk, n_co),
        in_specs=in_specs,
        out_specs=out_spec,
        out_shape=jax.ShapeDtypeStruct((n_blk, M, cout_p), jnp.bfloat16),
        compiler_params=pltpu.CompilerParams(
            dimension_semantics=("parallel", "parallel"),
            vmem_limit_bytes=vmem_limit),
        cost_estimate=cost,
    )


def _choose_nb(NB, M0, n_co):
    """Fold batch into matmul M until M >= 256, but keep >=2 grid steps
    (two v7x TensorCores) whenever the unfolded grid had >= 2."""
    nb = 1
    for cand in range(2, NB + 1):
        if NB % cand:
            continue
        if nb * M0 >= 256:
            break
        if (NB // cand) * n_co < 2 <= NB * n_co:
            break
        nb = cand
    return nb


# ------------------------------ module wrapper --------------------------------

def make_conv2d_block(key, cin, cout, kernel_size, stride=1, padding=1,
                      residual=False):
    """Params for: nn.Conv2d(cin,cout,k,stride,padding) -> BatchNorm2d -> ReLU.

    Eval-mode BatchNorm (running stats) is folded into the conv weights/shift.
    """
    as2 = lambda v: (v, v) if isinstance(v, int) else tuple(v)
    kh, kw = as2(kernel_size)
    sh, sw = as2(stride)
    ph, pw = as2(padding)

    k_w, k_b, k_g, k_be, k_m, k_v = jax.random.split(key, 6)
    fan_in = cin * kh * kw
    bound = 1.0 / math.sqrt(fan_in)
    w = jax.random.uniform(k_w, (cout, cin, kh, kw), jnp.float32, -bound, bound)
    bias = jax.random.uniform(k_b, (cout,), jnp.float32, -bound, bound)

    gamma = 1.0 + 0.1 * jax.random.normal(k_g, (cout,), jnp.float32)
    beta = 0.1 * jax.random.normal(k_be, (cout,), jnp.float32)
    mean = 0.1 * jax.random.normal(k_m, (cout,), jnp.float32)
    var = 1.0 + 0.1 * jnp.abs(jax.random.normal(k_v, (cout,), jnp.float32))
    eps = 1e-5

    scale = gamma / jnp.sqrt(var + eps)
    shift = (bias - mean) * scale + beta

    # K-packing: full im2col (kh*kw*cin) for small-cin layers (stems),
    # width-only packing (kw*cin) for larger cin to keep HBM duplication at kw x.
    pack_h = kh * kw * cin <= 512
    k_real = (kh * kw * cin) if pack_h else (kw * cin)
    kc = _round_up(k_real, 128)                 # lane-dense contraction dim
    cout_p = _round_up(cout, 128)
    tn = 128                                    # v5e MXU width; ~32-vreg accumulator

    w_folded = w * scale[:, None, None, None]   # fold BN scale in f32
    wk = jnp.transpose(w_folded, (2, 3, 1, 0))  # (kh, kw, cin, cout)
    if pack_h:
        wk = wk.reshape(1, kh * kw * cin, cout)
    else:
        wk = wk.reshape(kh, kw * cin, cout)
    wk = jnp.pad(wk, ((0, 0), (0, kc - k_real), (0, cout_p - cout)))

    return dict(
        w_bf16=wk.astype(jnp.bfloat16),
        shift=jnp.pad(shift, (0, cout_p - cout)).reshape(1, cout_p),
        # unfolded params kept only for the pure-JAX reference check
        w=w, bias=bias, gamma=gamma, beta=beta, mean=mean, var=var, eps=eps,
        cin=cin, cout=cout, cout_p=cout_p, tn=tn,
        pack_h=pack_h, K_real=k_real, Kc=kc,
        kernel=(kh, kw), stride=(sh, sw), padding=(ph, pw), residual=residual,
    )


def conv2d_block_nhwc(x, p):
    """NHWC forward pass: x (N, H, W, cin) float -> (N, Ho, Wo, cout) bfloat16.

    Chained layers should use this entry point directly to keep activations in
    NHWC bf16 and avoid per-layer NCHW<->NHWC HBM round trips."""
    NB, H, W, cin = x.shape
    assert cin == p["cin"]
    kh, kw = p["kernel"]
    sh, sw = p["stride"]
    ph, pw = p["padding"]
    cout, cout_p, tn = p["cout"], p["cout_p"], p["tn"]
    pack_h, K_real, Kc = p["pack_h"], p["K_real"], p["Kc"]

    Ho = (H + 2 * ph - kh) // sh + 1
    Wo = (W + 2 * pw - kw) // sw + 1
    Wo_p = _round_up(Wo, 8)                     # sublane-dense output width

    xb = x.astype(jnp.bfloat16)
    xpad = jnp.pad(xb, ((0, 0), (ph, ph), (pw, pw), (0, 0)))

    if pack_h:
        # full im2col: fold (kh, kw, cin) into the contraction dim; kernel does
        # a single matmul per grid step over rows indexed directly by output.
        cols = [xpad[:, ti:ti + (Ho - 1) * sh + 1:sh,
                     tj:tj + (Wo - 1) * sw + 1:sw, :]
                for ti in range(kh) for tj in range(kw)]
        xw = jnp.concatenate(cols, axis=-1)     # (N, Ho, Wo, kh*kw*cin)
        Hr = Ho
        row_offs = (0,)
    else:
        # fold only (kw, cin) into K; kernel loops over kh height taps.
        cols = [xpad[:, :, tj:tj + (Wo - 1) * sw + 1:sw, :] for tj in range(kw)]
        xw = jnp.concatenate(cols, axis=-1)     # (N, Hpad, Wo, kw*cin)
        if sh == 1:
            Hr = Ho + kh - 1
            xw = xw[:, :Hr]
            row_offs = tuple(ti * Wo_p for ti in range(kh))
        else:
            # stride-phase reorg over height: xr[n, ph*Hq + r] = xw[n, r*sh + ph]
            Hq = Ho + (kh - 1) // sh
            extra = max(0, Hq * sh - xw.shape[1])
            xw = jnp.pad(xw, ((0, 0), (0, extra), (0, 0), (0, 0)))[:, :Hq * sh]
            xw = xw.reshape(NB, Hq, sh, Wo, K_real).transpose(0, 2, 1, 3, 4)
            xw = xw.reshape(NB, sh * Hq, Wo, K_real)
            Hr = sh * Hq
            row_offs = tuple(((ti % sh) * Hq + ti // sh) * Wo_p
                             for ti in range(kh))

    xw = jnp.pad(xw, ((0, 0), (0, 0), (0, Wo_p - Wo), (0, Kc - K_real)))

    M0 = Ho * Wo_p
    n_co = cout_p // tn
    nb = _choose_nb(NB, M0, n_co) if pack_h else 1
    n_blk = NB // nb
    M = nb * M0
    R = (NB * Hr * Wo_p) // n_blk               # rows per image block
    xw = xw.reshape(n_blk, R, Kc)

    args = [xw, p["w_bf16"], p["shift"]]
    if p["residual"]:
        assert (Ho, Wo, cout) == (H, W, cin), "residual needs shape-preserving conv"
        res = jnp.pad(xb, ((0, 0), (0, 0), (0, Wo_p - W), (0, cout_p - cin)))
        args.append(res.reshape(n_blk, M, cout_p))   # residual in bf16

    call = _build_conv_call(n_blk, R, Kc, cout_p, len(row_offs), row_offs, M, tn,
                            p["residual"], True)
    y = call(*args)                              # (n_blk, M, cout_p) bf16
    y = y.reshape(NB, Ho, Wo_p, cout_p)[:, :, :Wo, :cout]
    return y


def conv2d_block(x_nchw, p):
    """PyTorch-layout forward: (N, Cin, H, W) -> (N, Cout, Ho, Wo), bf16 values."""
    y = conv2d_block_nhwc(jnp.transpose(x_nchw, (0, 2, 3, 1)), p)
    return jnp.transpose(y, (0, 3, 1, 2))


# ------------------------------ pure-JAX reference ----------------------------

def conv2d_block_ref(x, p):
    sh, sw = p["stride"]
    ph, pw = p["padding"]
    y = lax.conv_general_dilated(
        x, p["w"], window_strides=(sh, sw), padding=((ph, ph), (pw, pw)),
        dimension_numbers=("NCHW", "OIHW", "NCHW"),
        precision=lax.Precision.HIGHEST)
    y = y + p["bias"][None, :, None, None]
    scale = (p["gamma"] / jnp.sqrt(p["var"] + p["eps"]))[None, :, None, None]
    y = (y - p["mean"][None, :, None, None]) * scale + p["beta"][None, :, None, None]
    if p["residual"]:
        y = y + x
    return jnp.maximum(y, 0.0)


# ------------------------------------- main -----------------------------------

if __name__ == "__main__":
    root = jax.random.PRNGKey(0)
    k_x, k_x64, k_xf, k_p1, k_p2, k_p3, k_p4, k_p5 = jax.random.split(root, 8)

    def check(y, ref):
        assert y.shape == ref.shape, (y.shape, ref.shape)
        y32 = jnp.asarray(y, jnp.float32)
        assert bool(jnp.all(jnp.isfinite(y32)))
        err = float(jnp.max(jnp.abs(y32 - ref)))
        tol = 5e-2 * float(jnp.max(jnp.abs(ref))) + 2e-2   # bf16 tolerance
        assert err <= tol, (err, tol)

    # 1) residual 3x3 / stride-1 block (im2col path, residual + ReLU)
    x = jax.random.normal(k_x, (2, 32, 16, 16), jnp.float32)
    p1 = make_conv2d_block(k_p1, 32, 32, 3, stride=1, padding=1, residual=True)
    y1 = jax.block_until_ready(conv2d_block(x, p1))
    check(y1, conv2d_block_ref(x, p1))

    # 2) strided 3x3 downsampling block (im2col path, stride 2)
    p2 = make_conv2d_block(k_p2, 32, 64, 3, stride=2, padding=1, residual=False)
    y2 = jax.block_until_ready(conv2d_block(x, p2))
    check(y2, conv2d_block_ref(x, p2))

    # 3) asymmetric-stride 5x5 stem (cin=3): im2col path + batch folded into M
    xf = jax.random.normal(k_xf, (4, 3, 12, 24), jnp.float32)
    p3 = make_conv2d_block(k_p3, 3, 32, 5, stride=(1, 2), padding=2, residual=False)
    y3 = jax.block_until_ready(conv2d_block(xf, p3))
    check(y3, conv2d_block_ref(xf, p3))

    # 4) larger-cin residual block: exercises the width-packed kh-tap path (stride 1)
    x64 = jax.random.normal(k_x64, (2, 64, 16, 16), jnp.float32)
    p4 = make_conv2d_block(k_p4, 64, 64, 3, stride=1, padding=1, residual=True)
    y4 = jax.block_until_ready(conv2d_block(x64, p4))
    check(y4, conv2d_block_ref(x64, p4))

    # 5) larger-cin strided block: width-packed kh-tap path with height-phase reorg
    p5 = make_conv2d_block(k_p5, 64, 128, 3, stride=2, padding=1, residual=False)
    y5 = jax.block_until_ready(conv2d_block(x64, p5))
    check(y5, conv2d_block_ref(x64, p5))

    assert y1.shape == (2, 32, 16, 16)
    assert y2.shape == (2, 64, 8, 8)
    assert y3.shape == (4, 32, 12, 12)
    assert y4.shape == (2, 64, 16, 16)
    assert y5.shape == (2, 128, 8, 8)
    print("KERNEL_OK")
</pallas_src>

<mosaic_0001>
module attributes {stable_mosaic.version = 11 : i64} {
  func.func @_conv_bn_act_kernel(%arg0: i32, %arg1: i32, %arg2: memref<1x256x384xbf16, #tpu.memory_space<vmem>>, %arg3: memref<1x384x128xbf16, #tpu.memory_space<vmem>>, %arg4: memref<1x128xf32, #tpu.memory_space<vmem>>, %arg5: memref<1x256x128xbf16, #tpu.memory_space<vmem>>, %arg6: memref<1x256x128xbf16, #tpu.memory_space<vmem>>) attributes {dimension_semantics = [#tpu.dimension_semantics<parallel>, #tpu.dimension_semantics<parallel>], iteration_bounds = array<i64: 2, 1>, scalar_prefetch = 0 : i64, scratch_operands = 0 : i64, tpu.core_type = #tpu.core_type<tc>, window_params = [{transform_indices = @transform_0, window_bounds = array<i64: 1, 256, 384>}, {transform_indices = @transform_1, window_bounds = array<i64: 1, 384, 128>}, {transform_indices = @transform_2, window_bounds = array<i64: 1, 128>}, {transform_indices = @transform_3, window_bounds = array<i64: 1, 256, 128>}, {transform_indices = @transform_4, window_bounds = array<i64: 1, 256, 128>}]} {
    %c0 = arith.constant 0 : index
    %c0_0 = arith.constant 0 : index
    %c0_1 = arith.constant 0 : index
    %0 = vector.load %arg2[%c0, %c0_0, %c0_1] : memref<1x256x384xbf16, #tpu.memory_space<vmem>>, vector<1x256x384xbf16>
    %1 = vector.shape_cast %0 : vector<1x256x384xbf16> to vector<256x384xbf16>
    %c0_2 = arith.constant 0 : index
    %c0_3 = arith.constant 0 : index
    %c0_4 = arith.constant 0 : index
    %2 = vector.load %arg3[%c0_2, %c0_3, %c0_4] : memref<1x384x128xbf16, #tpu.memory_space<vmem>>, vector<1x384x128xbf16>
    %3 = vector.shape_cast %2 : vector<1x384x128xbf16> to vector<384x128xbf16>
    %cst = arith.constant dense<0.000000e+00> : vector<256x128xf32>
    %4 = tpu.matmul %1, %3, %cst {dimension_numbers = #tpu.dot_dimension_numbers<[1], [0], [0], [1], [0, 0, 1, 1], [], []>} : vector<256x384xbf16>, vector<384x128xbf16>, vector<256x128xf32> -> vector<256x128xf32>
    %c0_5 = arith.constant 0 : index
    %c0_6 = arith.constant 0 : index
    %5 = vector.load %arg4[%c0_5, %c0_6] : memref<1x128xf32, #tpu.memory_space<vmem>>, vector<1x128xf32>
    %6 = vector.broadcast %5 : vector<1x128xf32> to vector<256x128xf32>
    %7 = arith.addf %4, %6 : vector<256x128xf32>
    %c0_7 = arith.constant 0 : index
    %c0_8 = arith.constant 0 : index
    %c0_9 = arith.constant 0 : index
    %8 = vector.load %arg5[%c0_7, %c0_8, %c0_9] : memref<1x256x128xbf16, #tpu.memory_space<vmem>>, vector<1x256x128xbf16>
    %9 = vector.shape_cast %8 : vector<1x256x128xbf16> to vector<256x128xbf16>
    %10 = arith.extf %9 : vector<256x128xbf16> to vector<256x128xf32>
    %11 = arith.addf %7, %10 : vector<256x128xf32>
    %cst_10 = arith.constant 0.000000e+00 : f32
    %12 = vector.broadcast %cst_10 : f32 to vector<256x128xf32>
    %13 = arith.maximumf %11, %12 : vector<256x128xf32>
    %14 = arith.truncf %13 : vector<256x128xf32> to vector<256x128xbf16>
    %c0_11 = arith.constant 0 : index
    %c0_12 = arith.constant 0 : index
    %c0_13 = arith.constant 0 : index
    %15 = vector.load %arg6[%c0_11, %c0_12, %c0_13] : memref<1x256x128xbf16, #tpu.memory_space<vmem>>, vector<1x256x128xbf16>
    %16 = vector.shape_cast %15 : vector<1x256x128xbf16> to vector<256x128xbf16>
    %17 = vector.shape_cast %14 : vector<256x128xbf16> to vector<1x256x128xbf16>
    tpu.vector_store %arg6[%c0_11, %c0_12, %c0_13], %17 {strides = array<i32>} : memref<1x256x128xbf16, #tpu.memory_space<vmem>>, vector<1x256x128xbf16>,
    return
  }
  func.func @transform_0(%arg0: i32, %arg1: i32) -> (i32, i32, i32) {
    %c0_i32 = arith.constant 0 : i32
    %c0_i32_0 = arith.constant 0 : i32
    %c0_i32_1 = arith.constant 0 : i32
    return %arg0, %c0_i32, %c0_i32_0 : i32, i32, i32
  }
  func.func @transform_1(%arg0: i32, %arg1: i32) -> (i32, i32, i32) {
    %c0_i32 = arith.constant 0 : i32
    %c0_i32_0 = arith.constant 0 : i32
    %c0_i32_1 = arith.constant 0 : i32
    return %c0_i32, %c0_i32_0, %arg1 : i32, i32, i32
  }
  func.func @transform_2(%arg0: i32, %arg1: i32) -> (i32, i32) {
    %c0_i32 = arith.constant 0 : i32
    %c0_i32_0 = arith.constant 0 : i32
    return %c0_i32, %arg1 : i32, i32
  }
  func.func @transform_3(%arg0: i32, %arg1: i32) -> (i32, i32, i32) {
    %c0_i32 = arith.constant 0 : i32
    %c0_i32_0 = arith.constant 0 : i32
    return %arg0, %c0_i32, %arg1 : i32, i32, i32
  }
  func.func @transform_4(%arg0: i32, %arg1: i32) -> (i32, i32, i32) {
    %c0_i32 = arith.constant 0 : i32
    %c0_i32_0 = arith.constant 0 : i32
    return %arg0, %c0_i32, %arg1 : i32, i32, i32
  }
}

</mosaic_0001>

<llo_original>
// kernel: tpu_custom_call.1
$region0: #{tpu_custom_call.1}
  #allocation0 [shape = 'u32[]', space=smem, size = 0x4, offset = 0x4, fixed_abs, tag = 'smem constant byte address 0x4 - core index']
  #allocation1 [shape = 'u32[144,128]{1,0:T(1,128)}', space=vmem, size = 0x12000, scoped, tag = 'internal scratch']
  %s0 = inlined_call_operand.hbm [shape: bf16[2,256,384], index: 0, kind: input, shape index: {}]
  %s1 = inlined_call_operand.hbm [shape: bf16[1,384,128], index: 1, kind: input, shape index: {}]
  %s2 = inlined_call_operand.vmem [shape: f32[1,128], index: 2, kind: input, shape index: {}]
  %s3 = inlined_call_operand.hbm [shape: bf16[2,256,128], index: 3, kind: input, shape index: {}]
  %s4 = inlined_call_operand.hbm [shape: bf16[2,256,128], index: 4, kind: output, shape index: {}]
  %s5 = sld [smem:[#allocation0]]
  $region61: #{tpu_custom_call.1} parent=0
    _
  %s7 = ssub.s32 1, %s5
  %s8 = scalar_select 0, %s7, %s5
  $region1: #{tpu_custom_call.1} parent=0
    #allocation2 [shape = 'u8[393216]{0}', space=vmem, size = 0x60000, scoped, tag = 'input window, operand 0']
    #allocation3 [shape = 's32[2]{0}', space=sflag, size = 0x8, scoped, tag = 'scoped memory for tpu_custom_call.1']
    #allocation4 [shape = 's32[2]{0}', space=sflag, size = 0x8, scoped, tag = 'scoped memory for tpu_custom_call.1']
    #allocation5 [shape = 'u8[98304]{0}', space=vmem, size = 0x18000, scoped, tag = 'input window, operand 1, single buffered']
    #allocation6 [shape = 's32[1]{0}', space=sflag, size = 0x4, scoped, tag = 'scoped memory for tpu_custom_call.1']
    #allocation7 [shape = 'u8[131072]{0}', space=vmem, size = 0x20000, scoped, tag = 'input window, operand 3']
    #allocation8 [shape = 'u8[131072]{0}', space=vmem, size = 0x20000, scoped, tag = 'output window, operand 0']
    %9 = vsyncpa [#allocation3], 0
    %s10 = scalar_lea.sflag [#allocation3], 1
    %11 = vsyncpa %s10, 0
    %12 = vsyncpa [#allocation6], 0
    %13 = vsyncpa [#allocation4], 0
    %s14 = scalar_lea.sflag [#allocation4], 1
    %15 = vsyncpa %s14, 0
    loop: start=0, step=1, limit=4
    $region2: #{tpu_custom_call.1} parent=1 // loop_pre_header
      _
    $region3: #{tpu_custom_call.1} parent=1 // loop_header
      %s17 = sphi 0, %s21
      %p18 = scmp.ge.s32.totalorder %s17, 4
      %s24 = sphi 0, %s36
      %s25 = sphi 0, %s32
      %s26 = sphi 0, %s24
      %s27 = sphi 0, %s25
      %s28 = sphi 0, %s26
      %s29 = sphi 0, %s27
      %s39 = sphi 0, %s41
      %s42 = sphi 0, %s39
      %s43 = sphi 0, %s42
      %s59 = sphi 0, %s43
      %s65 = sphi 0, %s67
      %s68 = sphi 0, %s65
      %s69 = sphi 0, %s68
      %s85 = sphi 0, %s69
      %s91 = sphi 0, %s93
      %s94 = sphi 0, %s91
      %s95 = sphi 0, %s94
      %s111 = sphi 0, %s95
      %s119 = sphi 0, %s121
      %s122 = sphi 0, %s119
      %s123 = sphi 0, %s122
      %s139 = sphi 0, %s123
      %s147 = sphi 0, %s149
      %s150 = sphi 0, %s147
      %s151 = sphi 0, %s150
      %s167 = sphi 0, %s151
    $region4: #{tpu_custom_call.1} parent=1 // loop_header_branch
      %20 = sbr.rel (%p18) target = $region8
    $region5: #{tpu_custom_call.1} parent=1 // loop_body
      %s22 = ssub.s32 %s17, 1
      %s23 = ssub.s32 %s17, 2
      %s30 = sadd.s32 1, %s25
      %p31 = scmp.ge.s32.totalorder %s30, 1
      %s32 = scalar_select %p31, 0, %s30
      %s33 = sadd.s32 1, %s24
      %s34 = scalar_select %p31, %s33, %s24
      %p35 = scmp.ge.s32.totalorder %s34, 2
      %s36 = scalar_select %p35, 0, %s34
      %s37 = ssub.s32 %s24, %s36
      %p38 = scmp.eq.s32.totalorder %s37, 0
      %s40 = sadd.s32 %s39, 1
      %s41 = scalar_select %p38, %s39, %s40
      %p44 = pneg %p38
      %p45 = scmp.eq.s32.totalorder %s17, 1
      %p46 = por %p44, %p45
      %p47 = scmp.ne.s32.totalorder %s39, %s42
      %p48 = scmp.eq.s32.totalorder %s17, 0
      %p49 = por %p47, %p48
      %p50 = scmp.ne.s32.totalorder %s39, %s42
      %p51 = scmp.eq.s32.totalorder %s22, 1
      %p52 = por %p50, %p51
      %p53 = scmp.ne.s32.totalorder %s42, %s43
      %p54 = scmp.eq.s32.totalorder %s22, 0
      %p55 = por %p53, %p54
      %p56 = scmp.ne.s32.totalorder %s42, %s43
      %p57 = scmp.eq.s32.totalorder %s23, 1
      %p58 = por %p56, %p57
      %p60 = scmp.ne.s32.totalorder %s43, %s59
      %p61 = scmp.eq.s32.totalorder %s23, 0
      %p62 = por %p60, %p61
      %s63 = ssub.s32 %s25, %s32
      %p64 = scmp.eq.s32.totalorder %s63, 0
      %s66 = sadd.s32 %s65, 1
      %s67 = scalar_select %p64, %s65, %s66
      %p70 = pneg %p64
      %p71 = scmp.eq.s32.totalorder %s17, 1
      %p72 = por %p70, %p71
      %p73 = scmp.ne.s32.totalorder %s65, %s68
      %p74 = scmp.eq.s32.totalorder %s17, 0
      %p75 = por %p73, %p74
      %p76 = scmp.ne.s32.totalorder %s65, %s68
      %p77 = scmp.eq.s32.totalorder %s22, 1
      %p78 = por %p76, %p77
      %p79 = scmp.ne.s32.totalorder %s68, %s69
      %p80 = scmp.eq.s32.totalorder %s22, 0
      %p81 = por %p79, %p80
      %p82 = scmp.ne.s32.totalorder %s68, %s69
      %p83 = scmp.eq.s32.totalorder %s23, 1
      %p84 = por %p82, %p83
      %p86 = scmp.ne.s32.totalorder %s69, %s85
      %p87 = scmp.eq.s32.totalorder %s23, 0
      %p88 = por %p86, %p87
      %s89 = ssub.s32 %s25, %s32
      %p90 = scmp.eq.s32.totalorder %s89, 0
      %s92 = sadd.s32 %s91, 1
      %s93 = scalar_select %p90, %s91, %s92
      %p96 = pneg %p90
      %p97 = scmp.eq.s32.totalorder %s17, 1
      %p98 = por %p96, %p97
      %p99 = scmp.ne.s32.totalorder %s91, %s94
      %p100 = scmp.eq.s32.totalorder %s17, 0
      %p101 = por %p99, %p100
      %p102 = scmp.ne.s32.totalorder %s91, %s94
      %p103 = scmp.eq.s32.totalorder %s22, 1
      %p104 = por %p102, %p103
      %p105 = scmp.ne.s32.totalorder %s94, %s95
      %p106 = scmp.eq.s32.totalorder %s22, 0
      %p107 = por %p105, %p106
      %p108 = scmp.ne.s32.totalorder %s94, %s95
      %p109 = scmp.eq.s32.totalorder %s23, 1
      %p110 = por %p108, %p109
      %p112 = scmp.ne.s32.totalorder %s95, %s111
      %p113 = scmp.eq.s32.totalorder %s23, 0
      %p114 = por %p112, %p113
      %s115 = ssub.s32 %s24, %s36
      %s116 = ssub.s32 %s25, %s32
      %s117 = sor.u32 %s115, %s116
      %p118 = scmp.eq.s32.totalorder %s117, 0
      %s120 = sadd.s32 %s119, 1
      %s121 = scalar_select %p118, %s119, %s120
      %p124 = pneg %p118
      %p125 = scmp.eq.s32.totalorder %s17, 1
      %p126 = por %p124, %p125
      %p127 = scmp.ne.s32.totalorder %s119, %s122
      %p128 = scmp.eq.s32.totalorder %s17, 0
      %p129 = por %p127, %p128
      %p130 = scmp.ne.s32.totalorder %s119, %s122
      %p131 = scmp.eq.s32.totalorder %s22, 1
      %p132 = por %p130, %p131
      %p133 = scmp.ne.s32.totalorder %s122, %s123
      %p134 = scmp.eq.s32.totalorder %s22, 0
      %p135 = por %p133, %p134
      %p136 = scmp.ne.s32.totalorder %s122, %s123
      %p137 = scmp.eq.s32.totalorder %s23, 1
      %p138 = por %p136, %p137
      %p140 = scmp.ne.s32.totalorder %s123, %s139
      %p141 = scmp.eq.s32.totalorder %s23, 0
      %p142 = por %p140, %p141
      %s143 = ssub.s32 %s24, %s36
      %s144 = ssub.s32 %s25, %s32
      %s145 = sor.u32 %s143, %s144
      %p146 = scmp.eq.s32.totalorder %s145, 0
      %s148 = sadd.s32 %s147, 1
      %s149 = scalar_select %p146, %s147, %s148
      %p152 = pneg %p146
      %p153 = scmp.eq.s32.totalorder %s17, 1
      %p154 = por %p152, %p153
      %p155 = scmp.ne.s32.totalorder %s147, %s150
      %p156 = scmp.eq.s32.totalorder %s17, 0
      %p157 = por %p155, %p156
      %p158 = scmp.ne.s32.totalorder %s147, %s150
      %p159 = scmp.eq.s32.totalorder %s22, 1
      %p160 = por %p158, %p159
      %p161 = scmp.ne.s32.totalorder %s150, %s151
      %p162 = scmp.eq.s32.totalorder %s22, 0
      %p163 = por %p161, %p162
      %p164 = scmp.ne.s32.totalorder %s150, %s151
      %p165 = scmp.eq.s32.totalorder %s23, 1
      %p166 = por %p164, %p165
      %p168 = scmp.ne.s32.totalorder %s151, %s167
      %p169 = scmp.eq.s32.totalorder %s23, 0
      %p170 = por %p168, %p169
      %p171 = scmp.le.s32.totalorder 1, %s17
      %p172 = scmp.lt.s32.totalorder %s17, 3
      %p173 = pnand %p171, %p172
      %p174 = pneg %p173
      // Predicated region
      $region9: #{tpu_custom_call.1} parent=5 // pred_check
        _
      $region10: #{tpu_custom_call.1} parent=5 // pred_check_branch
        %176 = sbr.rel (%p173) target = $region12
      $region11: #{tpu_custom_call.1} parent=5 // pred_region
        %s177 = ssub.s32 %s17, 1
        // Predicated region
        $region13: #{tpu_custom_call.1} parent=11 // pred_check
          %p178 = pneg %p81
        $region14: #{tpu_custom_call.1} parent=11 // pred_check_branch
          %180 = sbr.rel (%p178) target = $region16
        $region15: #{tpu_custom_call.1} parent=11 // pred_region
          %s182 = ssub.s32 3072, 3072
          %183 = vsyncadd [#allocation6], %s182
          %s184 = smul.addr %s27, 64
          %s185 = scalar_lea.hbm %s1, %s184
          %s186 = sshll.u32 [#allocation5], 4
          %s187 = int_to_ptr.vmem [resolvable:$true] %s186
          %192 = dma.hbm_to_vmem [thread:$0]  %s185, 3072, %s187, [#allocation6], 64, 64, 4
        $region16: #{tpu_custom_call.1} parent=11 // pred_fallthru
          _
        // Predicated region
        $region17: #{tpu_custom_call.1} parent=11 // pred_check
          %p193 = pneg %p107
        $region18: #{tpu_custom_call.1} parent=11 // pred_check_branch
          %195 = sbr.rel (%p193) target = $region20
        $region19: #{tpu_custom_call.1} parent=11 // pred_region
          %p196 = scmp.lt.s32.totalorder %s27, 0
          %s197 = scalar_select %p196, %s27, 0
          %s198 = scalar_lea.vmem %s2, %s197
        $region20: #{tpu_custom_call.1} parent=11 // pred_fallthru
          _
      $region12: #{tpu_custom_call.1} parent=5 // pred_fallthru
        _
      %p199 = scmp.lt.s32.totalorder %s17, 2
      // Predicated region
      $region21: #{tpu_custom_call.1} parent=5 // pred_check
        %p200 = pneg %p199
      $region22: #{tpu_custom_call.1} parent=5 // pred_check_branch
        %202 = sbr.rel (%p200) target = $region24
      $region23: #{tpu_custom_call.1} parent=5 // pred_region
        // Predicated region
        $region25: #{tpu_custom_call.1} parent=23 // pred_check
          %p203 = pneg %p49
        $region26: #{tpu_custom_call.1} parent=23 // pred_check_branch
          %205 = sbr.rel (%p203) target = $region28
        $region27: #{tpu_custom_call.1} parent=23 // pred_region
          %s206 = sand.u32 %s17, 1
          %s207 = scalar_lea.sflag [#allocation3], %s206
          %s208 = sand.u32 %s39, 1
          %s209 = smul.addr %s208, 384
          %s210 = scalar_lea.vmem [#allocation2], %s209
          %s212 = ssub.s32 6144, 6144
          %213 = vsyncadd %s207, %s212
          %s214 = smul.addr %s24, 96
          %s215 = smul.addr %s214, 64
          %s216 = scalar_lea.hbm %s0, %s215
          %s217 = sshll.u32 %s210, 4
          %s218 = int_to_ptr.vmem [resolvable:$true] %s217
          %223 = dma.hbm_to_vmem [thread:$0]  %s216, 6144, %s218, %s207, 192, 192, 12
        $region28: #{tpu_custom_call.1} parent=23 // pred_fallthru
          _
        // Predicated region
        $region29: #{tpu_custom_call.1} parent=23 // pred_check
          %p224 = pneg %p129
        $region30: #{tpu_custom_call.1} parent=23 // pred_check_branch
          %226 = sbr.rel (%p224) target = $region32
        $region31: #{tpu_custom_call.1} parent=23 // pred_region
          %s227 = sand.u32 %s17, 1
          %s228 = scalar_lea.sflag [#allocation3], %s227
          %s229 = sand.u32 %s119, 1
          %s230 = smul.addr %s229, 128
          %s231 = scalar_lea.vmem [#allocation7], %s230
          %s233 = ssub.s32 2048, 2048
          %234 = vsyncadd %s228, %s233
          %s235 = smul.addr %s24, 32
          %s236 = sadd.s32 %s25, %s235
          %s237 = smul.addr %s236, 64
          %s238 = scalar_lea.hbm %s3, %s237
          %s239 = sshll.u32 %s231, 4
          %s240 = int_to_ptr.vmem [resolvable:$true] %s239
          %245 = dma.hbm_to_vmem [thread:$0]  %s238, 2048, %s240, %s228, 64, 64, 4
        $region32: #{tpu_custom_call.1} parent=23 // pred_fallthru
          _
      $region24: #{tpu_custom_call.1} parent=5 // pred_fallthru
        _
      %p246 = scmp.le.s32.totalorder 1, %s17
      %p247 = scmp.lt.s32.totalorder %s17, 3
      %p248 = pnand %p246, %p247
      %p249 = pneg %p248
      // Predicated region
      $region33: #{tpu_custom_call.1} parent=5 // pred_check
        _
      $region34: #{tpu_custom_call.1} parent=5 // pred_check_branch
        %251 = sbr.rel (%p248) target = $region36
      $region35: #{tpu_custom_call.1} parent=5 // pred_region
        %s252 = ssub.s32 %s17, 1
        %s253 = sand.u32 %s22, 1
        %s254 = scalar_lea.sflag [#allocation3], %s253
        %s255 = sand.u32 %s42, 1
        %s256 = smul.addr %s255, 384
        %s257 = scalar_lea.vmem [#allocation2], %s256
        // Predicated region
        $region37: #{tpu_custom_call.1} parent=35 // pred_check
          %p258 = pneg %p55
        $region38: #{tpu_custom_call.1} parent=35 // pred_check_branch
          %260 = sbr.rel (%p258) target = $region40
        $region39: #{tpu_custom_call.1} parent=35 // pred_region
          %261 = dma.done %s254, 6144
        $region40: #{tpu_custom_call.1} parent=35 // pred_fallthru
          _
        // Predicated region
        $region41: #{tpu_custom_call.1} parent=35 // pred_check
          %p262 = pneg %p81
        $region42: #{tpu_custom_call.1} parent=35 // pred_check_branch
          %264 = sbr.rel (%p262) target = $region44
        $region43: #{tpu_custom_call.1} parent=35 // pred_region
          %265 = dma.done [#allocation6], 3072
        $region44: #{tpu_custom_call.1} parent=35 // pred_fallthru
          _
        %s266 = sand.u32 %s22, 1
        %s267 = scalar_lea.sflag [#allocation3], %s266
        %s268 = sand.u32 %s122, 1
        %s269 = smul.addr %s268, 128
        %s270 = scalar_lea.vmem [#allocation7], %s269
        // Predicated region
        $region45: #{tpu_custom_call.1} parent=35 // pred_check
          %p271 = pneg %p135
        $region46: #{tpu_custom_call.1} parent=35 // pred_check_branch
          %273 = sbr.rel (%p271) target = $region48
        $region47: #{tpu_custom_call.1} parent=35 // pred_region
          %274 = dma.done %s267, 2048
        $region48: #{tpu_custom_call.1} parent=35 // pred_fallthru
          _
        %s275 = sand.u32 %s22, 1
        %s276 = scalar_lea.sflag [#allocation3], %s275
        %s277 = sand.u32 %s42, 1
        %s278 = smul.addr %s277, 384
        %s279 = scalar_lea.vmem [#allocation2], %s278
        %p280 = pneg %p55
        %p281 = pneg %p52
        %p282 = pneg %p81
        %p283 = pneg %p78
        %p284 = scmp.lt.s32.totalorder %s27, 0
        %s285 = scalar_select %p284, %s27, 0
        %s286 = scalar_lea.vmem %s2, %s285
        %p287 = pneg %p107
        %p288 = pneg %p104
        %s289 = sand.u32 %s22, 1
        %s290 = scalar_lea.sflag [#allocation3], %s289
        %s291 = sand.u32 %s122, 1
        %s292 = smul.addr %s291, 128
        %s293 = scalar_lea.vmem [#allocation7], %s292
        %p294 = pneg %p135
        %p295 = pneg %p132
        %p296 = pneg %p163
        %p297 = pneg %p160
        %s298 = sand.u32 %s150, 1
        %s299 = scalar_lea.sflag [#allocation4], %s298
        %s300 = sand.u32 %s150, 1
        %s301 = smul.addr %s300, 128
        %s302 = scalar_lea.vmem [#allocation8], %s301
        %p303 = scmp.lt.s32.totalorder %s27, 0
        %s304 = scalar_select %p303, %s27, 0
        %s305 = scalar_lea.vmem %s2, %s304
        %v307 = vld [vmem:[%s257] sm:$0xff]
        %v308 = vld [vmem:[%s257 + $0x8] sm:$0xf]
        %v309 = vld [vmem:[%s257 + $0xc] sm:$0xff]
        %v310 = vld [vmem:[%s257 + $0x14] sm:$0xf]
        %v311 = vld [vmem:[%s257 + $0x18] sm:$0xff]
        %v312 = vld [vmem:[%s257 + $0x20] sm:$0xf]
        %v313 = vld [vmem:[%s257 + $0x24] sm:$0xff]
        %v314 = vld [vmem:[%s257 + $0x2c] sm:$0xf]
        %v315 = vld [vmem:[%s257 + $0x30] sm:$0xff]
        %v316 = vld [vmem:[%s257 + $0x38] sm:$0xf]
        %v317 = vld [vmem:[%s257 + $0x3c] sm:$0xff]
        %v318 = vld [vmem:[%s257 + $0x44] sm:$0xf]
        %v319 = vld [vmem:[%s257 + $0x48] sm:$0xff]
        %v320 = vld [vmem:[%s257 + $0x50] sm:$0xf]
        %v321 = vld [vmem:[%s257 + $0x54] sm:$0xff]
        %v322 = vld [vmem:[%s257 + $0x5c] sm:$0xf]
        %v323 = vld [vmem:[%s257 + $0x60] sm:$0xff]
        %v324 = vld [vmem:[%s257 + $0x68] sm:$0xf]
        %v325 = vld [vmem:[%s257 + $0x6c] sm:$0xff]
        %v326 = vld [vmem:[%s257 + $0x74] sm:$0xf]
        %v327 = vld [vmem:[%s257 + $0x78] sm:$0xff]
        %v328 = vld [vmem:[%s257 + $0x80] sm:$0xf]
        %v329 = vld [vmem:[%s257 + $0x84] sm:$0xff]
        %v330 = vld [vmem:[%s257 + $0x8c] sm:$0xf]
        %v331 = vld [vmem:[%s257 + $0x90] sm:$0xff]
        %v332 = vld [vmem:[%s257 + $0x98] sm:$0xf]
        %v333 = vld [vmem:[%s257 + $0x9c] sm:$0xff]
        %v334 = vld [vmem:[%s257 + $0xa4] sm:$0xf]
        %v335 = vld [vmem:[%s257 + $0xa8] sm:$0xff]
        %v336 = vld [vmem:[%s257 + $0xb0] sm:$0xf]
        %v337 = vld [vmem:[%s257 + $0xb4] sm:$0xff]
        %v338 = vld [vmem:[%s257 + $0xbc] sm:$0xf]
        %v339 = vld [vmem:[%s257 + $0xc0] sm:$0xff]
        %v340 = vld [vmem:[%s257 + $0xc8] sm:$0xf]
        %v341 = vld [vmem:[%s257 + $0xcc] sm:$0xff]
        %v342 = vld [vmem:[%s257 + $0xd4] sm:$0xf]
        %v343 = vld [vmem:[%s257 + $0xd8] sm:$0xff]
        %v344 = vld [vmem:[%s257 + $0xe0] sm:$0xf]
        %v345 = vld [vmem:[%s257 + $0xe4] sm:$0xff]
        %v346 = vld [vmem:[%s257 + $0xec] sm:$0xf]
        %v347 = vld [vmem:[%s257 + $0xf0] sm:$0xff]
        %v348 = vld [vmem:[%s257 + $0xf8] sm:$0xf]
        %v349 = vld [vmem:[%s257 + $0xfc] sm:$0xff]
        %v350 = vld [vmem:[%s257 + $0x104] sm:$0xf]
        %v351 = vld [vmem:[%s257 + $0x108] sm:$0xff]
        %v352 = vld [vmem:[%s257 + $0x110] sm:$0xf]
        %v353 = vld [vmem:[%s257 + $0x114] sm:$0xff]
        %v354 = vld [vmem:[%s257 + $0x11c] sm:$0xf]
        %v355 = vld [vmem:[%s257 + $0x120] sm:$0xff]
        %v356 = vld [vmem:[%s257 + $0x128] sm:$0xf]
        %v357 = vld [vmem:[%s257 + $0x12c] sm:$0xff]
        %v358 = vld [vmem:[%s257 + $0x134] sm:$0xf]
        %v359 = vld [vmem:[%s257 + $0x138] sm:$0xff]
        %v360 = vld [vmem:[%s257 + $0x140] sm:$0xf]
        %v361 = vld [vmem:[%s257 + $0x144] sm:$0xff]
        %v362 = vld [vmem:[%s257 + $0x14c] sm:$0xf]
        %v363 = vld [vmem:[%s257 + $0x150] sm:$0xff]
        %v364 = vld [vmem:[%s257 + $0x158] sm:$0xf]
        %v365 = vld [vmem:[%s257 + $0x15c] sm:$0xff]
        %v366 = vld [vmem:[%s257 + $0x164] sm:$0xf]
        %v367 = vld [vmem:[%s257 + $0x168] sm:$0xff]
        %v368 = vld [vmem:[%s257 + $0x170] sm:$0xf]
        %v369 = vld [vmem:[%s257 + $0x174] sm:$0xff]
        %v370 = vld [vmem:[%s257 + $0x17c] sm:$0xf]
        %v371 = vld [vmem:[#allocation5] sm:$0xf]
        %v372 = vld [vmem:[#allocation5 + $0x4] sm:$0xf]
        %v373 = vld [vmem:[#allocation5 + $0x8] sm:$0xf]
        %v374 = vld [vmem:[#allocation5 + $0xc] sm:$0xf]
        %v375 = vld [vmem:[#allocation5 + $0x10] sm:$0xf]
        %v376 = vld [vmem:[#allocation5 + $0x14] sm:$0xf]
        %v377 = vld [vmem:[#allocation5 + $0x18] sm:$0xf]
        %v378 = vld [vmem:[#allocation5 + $0x1c] sm:$0xf]
        %v379 = vld [vmem:[#allocation5 + $0x20] sm:$0xf]
        %v380 = vld [vmem:[#allocation5 + $0x24] sm:$0xf]
        %v381 = vld [vmem:[#allocation5 + $0x28] sm:$0xf]
        %v382 = vld [vmem:[#allocation5 + $0x2c] sm:$0xf]
        %v383 = vld [vmem:[#allocation5 + $0x30] sm:$0xf]
        %v384 = vld [vmem:[#allocation5 + $0x34] sm:$0xf]
        %v385 = vld [vmem:[#allocation5 + $0x38] sm:$0xf]
        %v386 = vld [vmem:[#allocation5 + $0x3c] sm:$0xf]
        %v387 = vld [vmem:[#allocation5 + $0x40] sm:$0xf]
        %v388 = vld [vmem:[#allocation5 + $0x44] sm:$0xf]
        %v389 = vld [vmem:[#allocation5 + $0x48] sm:$0xf]
        %v390 = vld [vmem:[#allocation5 + $0x4c] sm:$0xf]
        %v391 = vld [vmem:[#allocation5 + $0x50] sm:$0xf]
        %v392 = vld [vmem:[#allocation5 + $0x54] sm:$0xf]
        %v393 = vld [vmem:[#allocation5 + $0x58] sm:$0xf]
        %v394 = vld [vmem:[#allocation5 + $0x5c] sm:$0xf]
        %v395 = vld [vmem:[#allocation5 + $0x60] sm:$0xf]
        %v396 = vld [vmem:[#allocation5 + $0x64] sm:$0xf]
        %v397 = vld [vmem:[#allocation5 + $0x68] sm:$0xf]
        %v398 = vld [vmem:[#allocation5 + $0x6c] sm:$0xf]
        %v399 = vld [vmem:[#allocation5 + $0x70] sm:$0xf]
        %v400 = vld [vmem:[#allocation5 + $0x74] sm:$0xf]
        %v401 = vld [vmem:[#allocation5 + $0x78] sm:$0xf]
        %v402 = vld [vmem:[#allocation5 + $0x7c] sm:$0xf]
        %v403 = vld [vmem:[#allocation5 + $0x80] sm:$0xf]
        %v404 = vld [vmem:[#allocation5 + $0x84] sm:$0xf]
        %v405 = vld [vmem:[#allocation5 + $0x88] sm:$0xf]
        %v406 = vld [vmem:[#allocation5 + $0x8c] sm:$0xf]
        %v407 = vld [vmem:[#allocation5 + $0x90] sm:$0xf]
        %v408 = vld [vmem:[#allocation5 + $0x94] sm:$0xf]
        %v409 = vld [vmem:[#allocation5 + $0x98] sm:$0xf]
        %v410 = vld [vmem:[#allocation5 + $0x9c] sm:$0xf]
        %v411 = vld [vmem:[#allocation5 + $0xa0] sm:$0xf]
        %v412 = vld [vmem:[#allocation5 + $0xa4] sm:$0xf]
        %v413 = vld [vmem:[#allocation5 + $0xa8] sm:$0xf]
        %v414 = vld [vmem:[#allocation5 + $0xac] sm:$0xf]
        %v415 = vld [vmem:[#allocation5 + $0xb0] sm:$0xf]
        %v416 = vld [vmem:[#allocation5 + $0xb4] sm:$0xf]
        %v417 = vld [vmem:[#allocation5 + $0xb8] sm:$0xf]
        %v418 = vld [vmem:[#allocation5 + $0xbc] sm:$0xf]
        %v419 = vld [vmem:[%s305] sm:$0x1]
        %v421 = vlaneseq
        %v422 = vshrl.u32 %v421, 7
        %v423 = vsub.s32 0, %v422
        %v424 = vrot.slane %v419, %v423
        %v490 = vunpack.c.l.b16 %v307
        %v491 = vunpack.c.h.b16 %v307
        %v492 = vunpack.c.l.b16 %v308
        %v493 = vunpack.c.l.b16 %v309
        %v494 = vunpack.c.h.b16 %v309
        %v495 = vunpack.c.l.b16 %v310
        %v496 = vunpack.c.l.b16 %v311
        %v497 = vunpack.c.h.b16 %v311
        %v498 = vunpack.c.l.b16 %v312
        %v499 = vunpack.c.l.b16 %v313
        %v500 = vunpack.c.h.b16 %v313
        %v501 = vunpack.c.l.b16 %v314
        %v502 = vunpack.c.l.b16 %v315
        %v503 = vunpack.c.h.b16 %v315
        %v504 = vunpack.c.l.b16 %v316
        %v505 = vunpack.c.l.b16 %v317
        %v506 = vunpack.c.h.b16 %v317
        %v507 = vunpack.c.l.b16 %v318
        %v508 = vunpack.c.l.b16 %v319
        %v509 = vunpack.c.h.b16 %v319
        %v510 = vunpack.c.l.b16 %v320
        %v511 = vunpack.c.l.b16 %v321
        %v512 = vunpack.c.h.b16 %v321
        %v513 = vunpack.c.l.b16 %v322
        %v514 = vunpack.c.l.b16 %v323
        %v515 = vunpack.c.h.b16 %v323
        %v516 = vunpack.c.l.b16 %v324
        %v517 = vunpack.c.l.b16 %v325
        %v518 = vunpack.c.h.b16 %v325
        %v519 = vunpack.c.l.b16 %v326
        %v520 = vunpack.c.l.b16 %v327
        %v521 = vunpack.c.h.b16 %v327
        %v522 = vunpack.c.l.b16 %v328
        %v523 = vunpack.c.l.b16 %v329
        %v524 = vunpack.c.h.b16 %v329
        %v525 = vunpack.c.l.b16 %v330
        %v526 = vunpack.c.l.b16 %v331
        %v527 = vunpack.c.h.b16 %v331
        %v528 = vunpack.c.l.b16 %v332
        %v529 = vunpack.c.l.b16 %v333
        %v530 = vunpack.c.h.b16 %v333
        %v531 = vunpack.c.l.b16 %v334
        %v532 = vunpack.c.l.b16 %v335
        %v533 = vunpack.c.h.b16 %v335
        %v534 = vunpack.c.l.b16 %v336
        %v535 = vunpack.c.l.b16 %v337
        %v536 = vunpack.c.h.b16 %v337
        %v537 = vunpack.c.l.b16 %v338
        %v538 = vunpack.c.l.b16 %v339
        %v539 = vunpack.c.h.b16 %v339
        %v540 = vunpack.c.l.b16 %v340
        %v541 = vunpack.c.l.b16 %v341
        %v542 = vunpack.c.h.b16 %v341
        %v543 = vunpack.c.l.b16 %v342
        %v544 = vunpack.c.l.b16 %v343
        %v545 = vunpack.c.h.b16 %v343
        %v546 = vunpack.c.l.b16 %v344
        %v547 = vunpack.c.l.b16 %v345
        %v548 = vunpack.c.h.b16 %v345
        %v549 = vunpack.c.l.b16 %v346
        %v550 = vunpack.c.l.b16 %v347
        %v551 = vunpack.c.h.b16 %v347
        %v552 = vunpack.c.l.b16 %v348
        %v553 = vunpack.c.l.b16 %v349
        %v554 = vunpack.c.h.b16 %v349
        %v555 = vunpack.c.l.b16 %v350
        %v556 = vunpack.c.l.b16 %v351
        %v557 = vunpack.c.h.b16 %v351
        %v558 = vunpack.c.l.b16 %v352
        %v559 = vunpack.c.l.b16 %v353
        %v560 = vunpack.c.h.b16 %v353
        %v561 = vunpack.c.l.b16 %v354
        %v562 = vunpack.c.l.b16 %v355
        %v563 = vunpack.c.h.b16 %v355
        %v564 = vunpack.c.l.b16 %v356
        %v565 = vunpack.c.l.b16 %v357
        %v566 = vunpack.c.h.b16 %v357
        %v567 = vunpack.c.l.b16 %v358
        %v568 = vunpack.c.l.b16 %v359
        %v569 = vunpack.c.h.b16 %v359
        %v570 = vunpack.c.l.b16 %v360
        %v571 = vunpack.c.l.b16 %v361
        %v572 = vunpack.c.h.b16 %v361
        %v573 = vunpack.c.l.b16 %v362
        %v574 = vunpack.c.l.b16 %v363
        %v575 = vunpack.c.h.b16 %v363
        %v576 = vunpack.c.l.b16 %v364
        %v577 = vunpack.c.l.b16 %v365
        %v578 = vunpack.c.h.b16 %v365
        %v579 = vunpack.c.l.b16 %v366
        %v580 = vunpack.c.l.b16 %v367
        %v581 = vunpack.c.h.b16 %v367
        %v582 = vunpack.c.l.b16 %v368
        %v583 = vunpack.c.l.b16 %v369
        %v584 = vunpack.c.h.b16 %v369
        %v585 = vunpack.c.l.b16 %v370
        %v586 = vpack.c.b16 %v493, %v490
        %v587 = vpack.c.b16 %v494, %v491
        %v588 = vpack.c.b16 %v495, %v492
        %v589 = vpack.c.b16 %v499, %v496
        %v590 = vpack.c.b16 %v500, %v497
        %v591 = vpack.c.b16 %v501, %v498
        %v592 = vpack.c.b16 %v505, %v502
        %v593 = vpack.c.b16 %v506, %v503
        %v594 = vpack.c.b16 %v507, %v504
        %v595 = vpack.c.b16 %v511, %v508
        %v596 = vpack.c.b16 %v512, %v509
        %v597 = vpack.c.b16 %v513, %v510
        %v598 = vpack.c.b16 %v517, %v514
        %v599 = vpack.c.b16 %v518, %v515
        %v600 = vpack.c.b16 %v519, %v516
        %v601 = vpack.c.b16 %v523, %v520
        %v602 = vpack.c.b16 %v524, %v521
        %v603 = vpack.c.b16 %v525, %v522
        %v604 = vpack.c.b16 %v529, %v526
        %v605 = vpack.c.b16 %v530, %v527
        %v606 = vpack.c.b16 %v531, %v528
        %v607 = vpack.c.b16 %v535, %v532
        %v608 = vpack.c.b16 %v536, %v533
        %v609 = vpack.c.b16 %v537, %v534
        %v610 = vpack.c.b16 %v541, %v538
        %v611 = vpack.c.b16 %v542, %v539
        %v612 = vpack.c.b16 %v543, %v540
        %v613 = vpack.c.b16 %v547, %v544
        %v614 = vpack.c.b16 %v548, %v545
        %v615 = vpack.c.b16 %v549, %v546
        %v616 = vpack.c.b16 %v553, %v550
        %v617 = vpack.c.b16 %v554, %v551
        %v618 = vpack.c.b16 %v555, %v552
        %v619 = vpack.c.b16 %v559, %v556
        %v620 = vpack.c.b16 %v560, %v557
        %v621 = vpack.c.b16 %v561, %v558
        %v622 = vpack.c.b16 %v565, %v562
        %v623 = vpack.c.b16 %v566, %v563
        %v624 = vpack.c.b16 %v567, %v564
        %v625 = vpack.c.b16 %v571, %v568
        %v626 = vpack.c.b16 %v572, %v569
        %v627 = vpack.c.b16 %v573, %v570
        %v628 = vpack.c.b16 %v577, %v574
        %v629 = vpack.c.b16 %v578, %v575
        %v630 = vpack.c.b16 %v579, %v576
        %v631 = vpack.c.b16 %v583, %v580
        %v632 = vpack.c.b16 %v584, %v581
        %v633 = vpack.c.b16 %v585, %v582
        %v730 = vunpack.c.l.b16 %v371
        %v731 = vunpack.c.l.b16 %v372
        %v732 = vunpack.c.l.b16 %v373
        %v733 = vunpack.c.l.b16 %v374
        %v734 = vunpack.c.l.b16 %v375
        %v735 = vunpack.c.l.b16 %v376
        %v736 = vunpack.c.l.b16 %v377
        %v737 = vunpack.c.l.b16 %v378
        %v738 = vunpack.c.l.b16 %v379
        %v739 = vunpack.c.l.b16 %v380
        %v740 = vunpack.c.l.b16 %v381
        %v741 = vunpack.c.l.b16 %v382
        %v742 = vunpack.c.l.b16 %v383
        %v743 = vunpack.c.l.b16 %v384
        %v744 = vunpack.c.l.b16 %v385
        %v745 = vunpack.c.l.b16 %v386
        %v746 = vunpack.c.l.b16 %v387
        %v747 = vunpack.c.l.b16 %v388
        %v748 = vunpack.c.l.b16 %v389
        %v749 = vunpack.c.l.b16 %v390
        %v750 = vunpack.c.l.b16 %v391
        %v751 = vunpack.c.l.b16 %v392
        %v752 = vunpack.c.l.b16 %v393
        %v753 = vunpack.c.l.b16 %v394
        %v754 = vunpack.c.l.b16 %v395
        %v755 = vunpack.c.l.b16 %v396
        %v756 = vunpack.c.l.b16 %v397
        %v757 = vunpack.c.l.b16 %v398
        %v758 = vunpack.c.l.b16 %v399
        %v759 = vunpack.c.l.b16 %v400
        %v760 = vunpack.c.l.b16 %v401
        %v761 = vunpack.c.l.b16 %v402
        %v762 = vunpack.c.l.b16 %v403
        %v763 = vunpack.c.l.b16 %v404
        %v764 = vunpack.c.l.b16 %v405
        %v765 = vunpack.c.l.b16 %v406
        %v766 = vunpack.c.l.b16 %v407
        %v767 = vunpack.c.l.b16 %v408
        %v768 = vunpack.c.l.b16 %v409
        %v769 = vunpack.c.l.b16 %v410
        %v770 = vunpack.c.l.b16 %v411
        %v771 = vunpack.c.l.b16 %v412
        %v772 = vunpack.c.l.b16 %v413
        %v773 = vunpack.c.l.b16 %v414
        %v774 = vunpack.c.l.b16 %v415
        %v775 = vunpack.c.l.b16 %v416
        %v776 = vunpack.c.l.b16 %v417
        %v777 = vunpack.c.l.b16 %v418
        %v778 = vpack.c.b16 %v731, %v730
        %v779 = vpack.c.b16 %v733, %v732
        %v780 = vpack.c.b16 %v735, %v734
        %v781 = vpack.c.b16 %v737, %v736
        %v782 = vpack.c.b16 %v739, %v738
        %v783 = vpack.c.b16 %v741, %v740
        %v784 = vpack.c.b16 %v743, %v742
        %v785 = vpack.c.b16 %v745, %v744
        %v786 = vpack.c.b16 %v747, %v746
        %v787 = vpack.c.b16 %v749, %v748
        %v788 = vpack.c.b16 %v751, %v750
        %v789 = vpack.c.b16 %v753, %v752
        %v790 = vpack.c.b16 %v755, %v754
        %v791 = vpack.c.b16 %v757, %v756
        %v792 = vpack.c.b16 %v759, %v758
        %v793 = vpack.c.b16 %v761, %v760
        %v794 = vpack.c.b16 %v763, %v762
        %v795 = vpack.c.b16 %v765, %v764
        %v796 = vpack.c.b16 %v767, %v766
        %v797 = vpack.c.b16 %v769, %v768
        %v798 = vpack.c.b16 %v771, %v770
        %v799 = vpack.c.b16 %v773, %v772
        %v800 = vpack.c.b16 %v775, %v774
        %v801 = vpack.c.b16 %v777, %v776
        %826 = vmatprep.subr.bf16.mxu0 0
        %827 = vmatpush1.bf16.msra.mxu0 %v778
        %828 = vmatprep.subr.bf16.mxu0 0
        %829 = vmatpush1.bf16.msra.mxu0 %v779
        %830 = vmatprep.subr.bf16.mxu0 0
        %831 = vmatpush1.bf16.msra.mxu0 %v780
        %832 = vmatprep.subr.bf16.mxu0 0
        %833 = vmatpush1.bf16.msra.mxu0 %v781
        %834 = vmatprep.subr.bf16.mxu0 0
        %835 = vmatpush1.bf16.msra.mxu0 %v782
        %836 = vmatprep.subr.bf16.mxu0 0
        %837 = vmatpush1.bf16.msra.mxu0 %v783
        %838 = vmatprep.subr.bf16.mxu0 0
        %839 = vmatpush1.bf16.msra.mxu0 %v784
        %840 = vmatprep.subr.bf16.mxu0 0
        %841 = vmatpush1.bf16.msra.mxu0 %v785
        %842 = vmatprep.subr.bf16.mxu0 0
        %843 = vmatpush1.bf16.msra.mxu0 %v786
        %844 = vmatprep.subr.bf16.mxu0 0
        %845 = vmatpush1.bf16.msra.mxu0 %v787
        %846 = vmatprep.subr.bf16.mxu0 0
        %847 = vmatpush1.bf16.msra.mxu0 %v788
        %848 = vmatprep.subr.bf16.mxu0 0
        %849 = vmatpush1.bf16.msra.mxu0 %v789
        %850 = vmatprep.subr.bf16.mxu0 0
        %851 = vmatpush1.bf16.msra.mxu0 %v790
        %852 = vmatprep.subr.bf16.mxu0 0
        %853 = vmatpush1.bf16.msra.mxu0 %v791
        %854 = vmatprep.subr.bf16.mxu0 0
        %855 = vmatpush1.bf16.msra.mxu0 %v792
        %856 = vmatprep.subr.bf16.mxu0 0
        %857 = vmatpush1.bf16.msra.mxu0 %v793
        %858 = vmatprep.mubr.bf16.mxu0 %v587
        %859 = vmatmul.mubr.bf16.gmra.mrb[0].mxu0 %v586
        %v860 = vpop.f32.mrb[0].mxu0
        %v861 = vadd.f32 %v424, %v860
        %v862 = vpop.f32.mrb[0].mxu0
        %v863 = vpop.f32.mrb[0].mxu0
        %v864 = vadd.f32 %v424, %v863
        %v865 = vpop.f32.mrb[0].mxu0
        %866 = vmatprep.mubr.bf16.mxu0 %v590
        %867 = vmatmul.mubr.bf16.gmra.mrb[0].mxu0 %v589
        %v868 = vpop.f32.mrb[0].mxu0
        %v869 = vadd.f32 %v424, %v868
        %v870 = vpop.f32.mrb[0].mxu0
        %v871 = vpop.f32.mrb[0].mxu0
        %v872 = vadd.f32 %v424, %v871
        %v873 = vpop.f32.mrb[0].mxu0
        %874 = vmatprep.mubr.bf16.mxu0 %v593
        %875 = vmatmul.mubr.bf16.gmra.mrb[0].mxu0 %v592
        %v876 = vpop.f32.mrb[0].mxu0
        %v877 = vadd.f32 %v424, %v876
        %v878 = vpop.f32.mrb[0].mxu0
        %v879 = vpop.f32.mrb[0].mxu0
        %v880 = vadd.f32 %v424, %v879
        %v881 = vpop.f32.mrb[0].mxu0
        %882 = vmatprep.mubr.bf16.mxu0 %v596
        %883 = vmatmul.mubr.bf16.gmra.mrb[0].mxu0 %v595
        %v884 = vpop.f32.mrb[0].mxu0
        %v885 = vadd.f32 %v424, %v884
        %v886 = vpop.f32.mrb[0].mxu0
        %v887 = vpop.f32.mrb[0].mxu0
        %v888 = vadd.f32 %v424, %v887
        %v889 = vpop.f32.mrb[0].mxu0
        %890 = vmatprep.mubr.bf16.mxu0 %v599
        %891 = vmatmul.mubr.bf16.gmra.mrb[0].mxu0 %v598
        %v892 = vpop.f32.mrb[0].mxu0
        %v893 = vadd.f32 %v424, %v892
        %v894 = vpop.f32.mrb[0].mxu0
        %v895 = vpop.f32.mrb[0].mxu0
        %v896 = vadd.f32 %v424, %v895
        %v897 = vpop.f32.mrb[0].mxu0
        %898 = vmatprep.mubr.bf16.mxu0 %v602
        %899 = vmatmul.mubr.bf16.gmra.mrb[0].mxu0 %v601
        %v900 = vpop.f32.mrb[0].mxu0
        %v901 = vadd.f32 %v424, %v900
        %v902 = vpop.f32.mrb[0].mxu0
        %v903 = vpop.f32.mrb[0].mxu0
        %v904 = vadd.f32 %v424, %v903
        %v905 = vpop.f32.mrb[0].mxu0
        %906 = vmatprep.mubr.bf16.mxu0 %v605
        %907 = vmatmul.mubr.bf16.gmra.mrb[0].mxu0 %v604
        %v908 = vpop.f32.mrb[0].mxu0
        %v909 = vadd.f32 %v424, %v908
        %v910 = vpop.f32.mrb[0].mxu0
        %v911 = vpop.f32.mrb[0].mxu0
        %v912 = vadd.f32 %v424, %v911
        %v913 = vpop.f32.mrb[0].mxu0
        %914 = vmatprep.mubr.bf16.mxu0 %v608
        %915 = vmatmul.mubr.bf16.gmra.mrb[0].mxu0 %v607
        %v916 = vpop.f32.mrb[0].mxu0
        %v917 = vadd.f32 %v424, %v916
        %v918 = vpop.f32.mrb[0].mxu0
        %v919 = vpop.f32.mrb[0].mxu0
        %v920 = vadd.f32 %v424, %v919
        %v921 = vpop.f32.mrb[0].mxu0
        %922 = vmatprep.mubr.bf16.mxu0 %v611
        %923 = vmatmul.mubr.bf16.gmra.mrb[0].mxu0 %v610
        %v924 = vpop.f32.mrb[0].mxu0
        %v925 = vadd.f32 %v424, %v924
        %v926 = vpop.f32.mrb[0].mxu0
        %v927 = vpop.f32.mrb[0].mxu0
        %v928 = vadd.f32 %v424, %v927
        %v929 = vpop.f32.mrb[0].mxu0
        %930 = vmatprep.mubr.bf16.mxu0 %v614
        %931 = vmatmul.mubr.bf16.gmra.mrb[0].mxu0 %v613
        %v932 = vpop.f32.mrb[0].mxu0
        %v933 = vadd.f32 %v424, %v932
        %v934 = vpop.f32.mrb[0].mxu0
        %v935 = vpop.f32.mrb[0].mxu0
        %v936 = vadd.f32 %v424, %v935
        %v937 = vpop.f32.mrb[0].mxu0
        %938 = vmatprep.mubr.bf16.mxu0 %v617
        %939 = vmatmul.mubr.bf16.gmra.mrb[0].mxu0 %v616
        %v940 = vpop.f32.mrb[0].mxu0
        %v941 = vadd.f32 %v424, %v940
        %v942 = vpop.f32.mrb[0].mxu0
        %v943 = vpop.f32.mrb[0].mxu0
        %v944 = vadd.f32 %v424, %v943
        %v945 = vpop.f32.mrb[0].mxu0
        %946 = vmatprep.mubr.bf16.mxu0 %v620
        %947 = vmatmul.mubr.bf16.gmra.mrb[0].mxu0 %v619
        %v948 = vpop.f32.mrb[0].mxu0
        %v949 = vadd.f32 %v424, %v948
        %v950 = vpop.f32.mrb[0].mxu0
        %v951 = vpop.f32.mrb[0].mxu0
        %v952 = vadd.f32 %v424, %v951
        %v953 = vpop.f32.mrb[0].mxu0
        %954 = vmatprep.mubr.bf16.mxu0 %v623
        %955 = vmatmul.mubr.bf16.gmra.mrb[0].mxu0 %v622
        %v956 = vpop.f32.mrb[0].mxu0
        %v957 = vadd.f32 %v424, %v956
        %v958 = vpop.f32.mrb[0].mxu0
        %v959 = vpop.f32.mrb[0].mxu0
        %v960 = vadd.f32 %v424, %v959
        %v961 = vpop.f32.mrb[0].mxu0
        %962 = vmatprep.mubr.bf16.mxu0 %v626
        %963 = vmatmul.mubr.bf16.gmra.mrb[0].mxu0 %v625
        %v964 = vpop.f32.mrb[0].mxu0
        %v965 = vadd.f32 %v424, %v964
        %v966 = vpop.f32.mrb[0].mxu0
        %v967 = vpop.f32.mrb[0].mxu0
        %v968 = vadd.f32 %v424, %v967
        %v969 = vpop.f32.mrb[0].mxu0
        %970 = vmatprep.mubr.bf16.mxu0 %v629
        %971 = vmatmul.mubr.bf16.gmra.mrb[0].mxu0 %v628
        %v972 = vpop.f32.mrb[0].mxu0
        %v973 = vadd.f32 %v424, %v972
        %v974 = vpop.f32.mrb[0].mxu0
        %v975 = vpop.f32.mrb[0].mxu0
        %v976 = vadd.f32 %v424, %v975
        %v977 = vpop.f32.mrb[0].mxu0
        %978 = vmatprep.mubr.bf16.mxu0 %v632
        %979 = vmatmul.mubr.bf16.gmra.mrb[0].mxu0 %v631
        %v980 = vpop.f32.mrb[0].mxu0
        %v981 = vadd.f32 %v424, %v980
        %v982 = vpop.f32.mrb[0].mxu0
        %v983 = vpop.f32.mrb[0].mxu0
        %v984 = vadd.f32 %v424, %v983
        %v985 = vpop.f32.mrb[0].mxu0
        %986 = vdwg.mxu0
        %987 = vmatprep.subr.bf16.mxu0 0
        %988 = vmatpush1.bf16.msra.mxu0 %v794
        %989 = vmatprep.subr.bf16.mxu0 0
        %990 = vmatpush1.bf16.msra.mxu0 %v795
        %991 = vmatprep.subr.bf16.mxu0 0
        %992 = vmatpush1.bf16.msra.mxu0 %v796
        %993 = vmatprep.subr.bf16.mxu0 0
        %994 = vmatpush1.bf16.msra.mxu0 %v797
        %995 = vmatprep.subr.bf16.mxu0 0
        %996 = vmatpush1.bf16.msra.mxu0 %v798
        %997 = vmatprep.subr.bf16.mxu0 0
        %998 = vmatpush1.bf16.msra.mxu0 %v799
        %999 = vmatprep.subr.bf16.mxu0 0
        %1000 = vmatpush1.bf16.msra.mxu0 %v800
        %1001 = vmatprep.subr.bf16.mxu0 0
        %1002 = vmatpush1.bf16.msra.mxu0 %v801
        %1003 = vmatprep.subr.bf16.mxu0 0
        %1004 = vmatpush1.bf16.msra.mxu0 0
        %1005 = vmatprep.subr.bf16.mxu0 0
        %1006 = vmatpush1.bf16.msra.mxu0 0
        %1007 = vmatprep.subr.bf16.mxu0 0
        %1008 = vmatpush1.bf16.msra.mxu0 0
        %1009 = vmatprep.subr.bf16.mxu0 0
        %1010 = vmatpush1.bf16.msra.mxu0 0
        %1011 = vmatprep.subr.bf16.mxu0 0
        %1012 = vmatpush1.bf16.msra.mxu0 0
        %1013 = vmatprep.subr.bf16.mxu0 0
        %1014 = vmatpush1.bf16.msra.mxu0 0
        %1015 = vmatprep.subr.bf16.mxu0 0
        %1016 = vmatpush1.bf16.msra.mxu0 0
        %1017 = vmatprep.subr.bf16.mxu0 0
        %1018 = vmatpush1.bf16.msra.mxu0 0
        %1019 = vmatprep.mubr.bf16.mxu0 0
        %1020 = vmatmul.mubr.bf16.gmra.mrb[0].mxu0 %v588
        %v1021 = vpop.f32.mrb[0].mxu0
        %v1022 = vadd.f32 %v861, %v1021
        %v1023 = vpop.f32.mrb[0].mxu0
        %v1024 = vpop.f32.mrb[0].mxu0
        %v1025 = vadd.f32 %v864, %v1024
        %v1026 = vpop.f32.mrb[0].mxu0
        %1027 = vmatprep.mubr.bf16.mxu0 0
        %1028 = vmatmul.mubr.bf16.gmra.mrb[0].mxu0 %v591
        %v1029 = vpop.f32.mrb[0].mxu0
        %v1030 = vadd.f32 %v869, %v1029
        %v1031 = vpop.f32.mrb[0].mxu0
        %v1032 = vpop.f32.mrb[0].mxu0
        %v1033 = vadd.f32 %v872, %v1032
        %v1034 = vpop.f32.mrb[0].mxu0
        %1035 = vmatprep.mubr.bf16.mxu0 0
        %1036 = vmatmul.mubr.bf16.gmra.mrb[0].mxu0 %v594
        %v1037 = vpop.f32.mrb[0].mxu0
        %v1038 = vadd.f32 %v877, %v1037
        %v1039 = vpop.f32.mrb[0].mxu0
        %v1040 = vpop.f32.mrb[0].mxu0
        %v1041 = vadd.f32 %v880, %v1040
        %v1042 = vpop.f32.mrb[0].mxu0
        %1043 = vmatprep.mubr.bf16.mxu0 0
        %1044 = vmatmul.mubr.bf16.gmra.mrb[0].mxu0 %v597
        %v1045 = vpop.f32.mrb[0].mxu0
        %v1046 = vadd.f32 %v885, %v1045
        %v1047 = vpop.f32.mrb[0].mxu0
        %v1048 = vpop.f32.mrb[0].mxu0
        %v1049 = vadd.f32 %v888, %v1048
        %v1050 = vpop.f32.mrb[0].mxu0
        %1051 = vmatprep.mubr.bf16.mxu0 0
        %1052 = vmatmul.mubr.bf16.gmra.mrb[0].mxu0 %v600
        %v1053 = vpop.f32.mrb[0].mxu0
        %v1054 = vadd.f32 %v893, %v1053
        %v1055 = vpop.f32.mrb[0].mxu0
        %v1056 = vpop.f32.mrb[0].mxu0
        %v1057 = vadd.f32 %v896, %v1056
        %v1058 = vpop.f32.mrb[0].mxu0
        %1059 = vmatprep.mubr.bf16.mxu0 0
        %1060 = vmatmul.mubr.bf16.gmra.mrb[0].mxu0 %v603
        %v1061 = vpop.f32.mrb[0].mxu0
        %v1062 = vadd.f32 %v901, %v1061
        %v1063 = vpop.f32.mrb[0].mxu0
        %v1064 = vpop.f32.mrb[0].mxu0
        %v1065 = vadd.f32 %v904, %v1064
        %v1066 = vpop.f32.mrb[0].mxu0
        %1067 = vmatprep.mubr.bf16.mxu0 0
        %1068 = vmatmul.mubr.bf16.gmra.mrb[0].mxu0 %v606
        %v1069 = vpop.f32.mrb[0].mxu0
        %v1070 = vadd.f32 %v909, %v1069
        %v1071 = vpop.f32.mrb[0].mxu0
        %v1072 = vpop.f32.mrb[0].mxu0
        %v1073 = vadd.f32 %v912, %v1072
        %v1074 = vpop.f32.mrb[0].mxu0
        %1075 = vmatprep.mubr.bf16.mxu0 0
        %1076 = vmatmul.mubr.bf16.gmra.mrb[0].mxu0 %v609
        %v1077 = vpop.f32.mrb[0].mxu0
        %v1078 = vadd.f32 %v917, %v1077
        %v1079 = vpop.f32.mrb[0].mxu0
        %v1080 = vpop.f32.mrb[0].mxu0
        %v1081 = vadd.f32 %v920, %v1080
        %v1082 = vpop.f32.mrb[0].mxu0
        %1083 = vmatprep.mubr.bf16.mxu0 0
        %1084 = vmatmul.mubr.bf16.gmra.mrb[0].mxu0 %v612
        %v1085 = vpop.f32.mrb[0].mxu0
        %v1086 = vadd.f32 %v925, %v1085
        %v1087 = vpop.f32.mrb[0].mxu0
        %v1088 = vpop.f32.mrb[0].mxu0
        %v1089 = vadd.f32 %v928, %v1088
        %v1090 = vpop.f32.mrb[0].mxu0
        %1091 = vmatprep.mubr.bf16.mxu0 0
        %1092 = vmatmul.mubr.bf16.gmra.mrb[0].mxu0 %v615
        %v1093 = vpop.f32.mrb[0].mxu0
        %v1094 = vadd.f32 %v933, %v1093
        %v1095 = vpop.f32.mrb[0].mxu0
        %v1096 = vpop.f32.mrb[0].mxu0
        %v1097 = vadd.f32 %v936, %v1096
        %v1098 = vpop.f32.mrb[0].mxu0
        %1099 = vmatprep.mubr.bf16.mxu0 0
        %1100 = vmatmul.mubr.bf16.gmra.mrb[0].mxu0 %v618
        %v1101 = vpop.f32.mrb[0].mxu0
        %v1102 = vadd.f32 %v941, %v1101
        %v1103 = vpop.f32.mrb[0].mxu0
        %v1104 = vpop.f32.mrb[0].mxu0
        %v1105 = vadd.f32 %v944, %v1104
        %v1106 = vpop.f32.mrb[0].mxu0
        %1107 = vmatprep.mubr.bf16.mxu0 0
        %1108 = vmatmul.mubr.bf16.gmra.mrb[0].mxu0 %v621
        %v1109 = vpop.f32.mrb[0].mxu0
        %v1110 = vadd.f32 %v949, %v1109
        %v1111 = vpop.f32.mrb[0].mxu0
        %v1112 = vpop.f32.mrb[0].mxu0
        %v1113 = vadd.f32 %v952, %v1112
        %v1114 = vpop.f32.mrb[0].mxu0
        %1115 = vmatprep.mubr.bf16.mxu0 0
        %1116 = vmatmul.mubr.bf16.gmra.mrb[0].mxu0 %v624
        %v1117 = vpop.f32.mrb[0].mxu0
        %v1118 = vadd.f32 %v957, %v1117
        %v1119 = vpop.f32.mrb[0].mxu0
        %v1120 = vpop.f32.mrb[0].mxu0
        %v1121 = vadd.f32 %v960, %v1120
        %v1122 = vpop.f32.mrb[0].mxu0
        %1123 = vmatprep.mubr.bf16.mxu0 0
        %1124 = vmatmul.mubr.bf16.gmra.mrb[0].mxu0 %v627
        %v1125 = vpop.f32.mrb[0].mxu0
        %v1126 = vadd.f32 %v965, %v1125
        %v1127 = vpop.f32.mrb[0].mxu0
        %v1128 = vpop.f32.mrb[0].mxu0
        %v1129 = vadd.f32 %v968, %v1128
        %v1130 = vpop.f32.mrb[0].mxu0
        %1131 = vmatprep.mubr.bf16.mxu0 0
        %1132 = vmatmul.mubr.bf16.gmra.mrb[0].mxu0 %v630
        %v1133 = vpop.f32.mrb[0].mxu0
        %v1134 = vadd.f32 %v973, %v1133
        %v1135 = vpop.f32.mrb[0].mxu0
        %v1136 = vpop.f32.mrb[0].mxu0
        %v1137 = vadd.f32 %v976, %v1136
        %v1138 = vpop.f32.mrb[0].mxu0
        %1139 = vmatprep.mubr.bf16.mxu0 0
        %1140 = vmatmul.mubr.bf16.gmra.mrb[0].mxu0 %v633
        %v1141 = vpop.f32.mrb[0].mxu0
        %v1142 = vadd.f32 %v981, %v1141
        %v1143 = vpop.f32.mrb[0].mxu0
        %v1144 = vpop.f32.mrb[0].mxu0
        %v1145 = vadd.f32 %v984, %v1144
        %v1146 = vpop.f32.mrb[0].mxu0
        %1147 = vdwg.mxu0
        %v1148 = vld [vmem:[%s270] sm:$0xf]
        %v1149 = vld [vmem:[%s270 + $0x4] sm:$0xf]
        %v1150 = vld [vmem:[%s270 + $0x8] sm:$0xf]
        %v1151 = vld [vmem:[%s270 + $0xc] sm:$0xf]
        %v1152 = vld [vmem:[%s270 + $0x10] sm:$0xf]
        %v1153 = vld [vmem:[%s270 + $0x14] sm:$0xf]
        %v1154 = vld [vmem:[%s270 + $0x18] sm:$0xf]
        %v1155 = vld [vmem:[%s270 + $0x1c] sm:$0xf]
        %v1156 = vld [vmem:[%s270 + $0x20] sm:$0xf]
        %v1157 = vld [vmem:[%s270 + $0x24] sm:$0xf]
        %v1158 = vld [vmem:[%s270 + $0x28] sm:$0xf]
        %v1159 = vld [vmem:[%s270 + $0x2c] sm:$0xf]
        %v1160 = vld [vmem:[%s270 + $0x30] sm:$0xf]
        %v1161 = vld [vmem:[%s270 + $0x34] sm:$0xf]
        %v1162 = vld [vmem:[%s270 + $0x38] sm:$0xf]
        %v1163 = vld [vmem:[%s270 + $0x3c] sm:$0xf]
        %v1164 = vld [vmem:[%s270 + $0x40] sm:$0xf]
        %v1165 = vld [vmem:[%s270 + $0x44] sm:$0xf]
        %v1166 = vld [vmem:[%s270 + $0x48] sm:$0xf]
        %v1167 = vld [vmem:[%s270 + $0x4c] sm:$0xf]
        %v1168 = vld [vmem:[%s270 + $0x50] sm:$0xf]
        %v1169 = vld [vmem:[%s270 + $0x54] sm:$0xf]
        %v1170 = vld [vmem:[%s270 + $0x58] sm:$0xf]
        %v1171 = vld [vmem:[%s270 + $0x5c] sm:$0xf]
        %v1172 = vld [vmem:[%s270 + $0x60] sm:$0xf]
        %v1173 = vld [vmem:[%s270 + $0x64] sm:$0xf]
        %v1174 = vld [vmem:[%s270 + $0x68] sm:$0xf]
        %v1175 = vld [vmem:[%s270 + $0x6c] sm:$0xf]
        %v1176 = vld [vmem:[%s270 + $0x70] sm:$0xf]
        %v1177 = vld [vmem:[%s270 + $0x74] sm:$0xf]
        %v1178 = vld [vmem:[%s270 + $0x78] sm:$0xf]
        %v1179 = vld [vmem:[%s270 + $0x7c] sm:$0xf]
        %v1180 = vunpack.c.l.bf16 %v1148
        %v1181 = vunpack.c.l.bf16 %v1149
        %v1182 = vunpack.c.l.bf16 %v1150
        %v1183 = vunpack.c.l.bf16 %v1151
        %v1184 = vunpack.c.l.bf16 %v1152
        %v1185 = vunpack.c.l.bf16 %v1153
        %v1186 = vunpack.c.l.bf16 %v1154
        %v1187 = vunpack.c.l.bf16 %v1155
        %v1188 = vunpack.c.l.bf16 %v1156
        %v1189 = vunpack.c.l.bf16 %v1157
        %v1190 = vunpack.c.l.bf16 %v1158
        %v1191 = vunpack.c.l.bf16 %v1159
        %v1192 = vunpack.c.l.bf16 %v1160
        %v1193 = vunpack.c.l.bf16 %v1161
        %v1194 = vunpack.c.l.bf16 %v1162
        %v1195 = vunpack.c.l.bf16 %v1163
        %v1196 = vunpack.c.l.bf16 %v1164
        %v1197 = vunpack.c.l.bf16 %v1165
        %v1198 = vunpack.c.l.bf16 %v1166
        %v1199 = vunpack.c.l.bf16 %v1167
        %v1200 = vunpack.c.l.bf16 %v1168
        %v1201 = vunpack.c.l.bf16 %v1169
        %v1202 = vunpack.c.l.bf16 %v1170
        %v1203 = vunpack.c.l.bf16 %v1171
        %v1204 = vunpack.c.l.bf16 %v1172
        %v1205 = vunpack.c.l.bf16 %v1173
        %v1206 = vunpack.c.l.bf16 %v1174
        %v1207 = vunpack.c.l.bf16 %v1175
        %v1208 = vunpack.c.l.bf16 %v1176
        %v1209 = vunpack.c.l.bf16 %v1177
        %v1210 = vunpack.c.l.bf16 %v1178
        %v1211 = vunpack.c.l.bf16 %v1179
        %v1212 = vadd.f32 %v1022, %v1180
        %v1213 = vadd.f32 %v1025, %v1181
        %v1214 = vadd.f32 %v1030, %v1182
        %v1215 = vadd.f32 %v1033, %v1183
        %v1216 = vadd.f32 %v1038, %v1184
        %v1217 = vadd.f32 %v1041, %v1185
        %v1218 = vadd.f32 %v1046, %v1186
        %v1219 = vadd.f32 %v1049, %v1187
        %v1220 = vadd.f32 %v1054, %v1188
        %v1221 = vadd.f32 %v1057, %v1189
        %v1222 = vadd.f32 %v1062, %v1190
        %v1223 = vadd.f32 %v1065, %v1191
        %v1224 = vadd.f32 %v1070, %v1192
        %v1225 = vadd.f32 %v1073, %v1193
        %v1226 = vadd.f32 %v1078, %v1194
        %v1227 = vadd.f32 %v1081, %v1195
        %v1228 = vadd.f32 %v1086, %v1196
        %v1229 = vadd.f32 %v1089, %v1197
        %v1230 = vadd.f32 %v1094, %v1198
        %v1231 = vadd.f32 %v1097, %v1199
        %v1232 = vadd.f32 %v1102, %v1200
        %v1233 = vadd.f32 %v1105, %v1201
        %v1234 = vadd.f32 %v1110, %v1202
        %v1235 = vadd.f32 %v1113, %v1203
        %v1236 = vadd.f32 %v1118, %v1204
        %v1237 = vadd.f32 %v1121, %v1205
        %v1238 = vadd.f32 %v1126, %v1206
        %v1239 = vadd.f32 %v1129, %v1207
        %v1240 = vadd.f32 %v1134, %v1208
        %v1241 = vadd.f32 %v1137, %v1209
        %v1242 = vadd.f32 %v1142, %v1210
        %v1243 = vadd.f32 %v1145, %v1211
        %v1244 = vmax.f32 %v1212, 0.0
        %v1245 = vmax.f32 %v1213, 0.0
        %v1246 = vmax.f32 %v1214, 0.0
        %v1247 = vmax.f32 %v1215, 0.0
        %v1248 = vmax.f32 %v1216, 0.0
        %v1249 = vmax.f32 %v1217, 0.0
        %v1250 = vmax.f32 %v1218, 0.0
        %v1251 = vmax.f32 %v1219, 0.0
        %v1252 = vmax.f32 %v1220, 0.0
        %v1253 = vmax.f32 %v1221, 0.0
        %v1254 = vmax.f32 %v1222, 0.0
        %v1255 = vmax.f32 %v1223, 0.0
        %v1256 = vmax.f32 %v1224, 0.0
        %v1257 = vmax.f32 %v1225, 0.0
        %v1258 = vmax.f32 %v1226, 0.0
        %v1259 = vmax.f32 %v1227, 0.0
        %v1260 = vmax.f32 %v1228, 0.0
        %v1261 = vmax.f32 %v1229, 0.0
        %v1262 = vmax.f32 %v1230, 0.0
        %v1263 = vmax.f32 %v1231, 0.0
        %v1264 = vmax.f32 %v1232, 0.0
        %v1265 = vmax.f32 %v1233, 0.0
        %v1266 = vmax.f32 %v1234, 0.0
        %v1267 = vmax.f32 %v1235, 0.0
        %v1268 = vmax.f32 %v1236, 0.0
        %v1269 = vmax.f32 %v1237, 0.0
        %v1270 = vmax.f32 %v1238, 0.0
        %v1271 = vmax.f32 %v1239, 0.0
        %v1272 = vmax.f32 %v1240, 0.0
        %v1273 = vmax.f32 %v1241, 0.0
        %v1274 = vmax.f32 %v1242, 0.0
        %v1275 = vmax.f32 %v1243, 0.0
        %v1276 = vpack.c.bf16 %v1245, %v1244
        %v1277 = vpack.c.bf16 %v1247, %v1246
        %v1278 = vpack.c.bf16 %v1249, %v1248
        %v1279 = vpack.c.bf16 %v1251, %v1250
        %v1280 = vpack.c.bf16 %v1253, %v1252
        %v1281 = vpack.c.bf16 %v1255, %v1254
        %v1282 = vpack.c.bf16 %v1257, %v1256
        %v1283 = vpack.c.bf16 %v1259, %v1258
        %v1284 = vpack.c.bf16 %v1261, %v1260
        %v1285 = vpack.c.bf16 %v1263, %v1262
        %v1286 = vpack.c.bf16 %v1265, %v1264
        %v1287 = vpack.c.bf16 %v1267, %v1266
        %v1288 = vpack.c.bf16 %v1269, %v1268
        %v1289 = vpack.c.bf16 %v1271, %v1270
        %v1290 = vpack.c.bf16 %v1273, %v1272
        %v1291 = vpack.c.bf16 %v1275, %v1274
        %v1308 = vunpack.c.l.b16 %v1276
        %v1309 = vunpack.c.h.b16 %v1276
        %v1310 = vunpack.c.l.b16 %v1277
        %v1311 = vunpack.c.h.b16 %v1277
        %v1312 = vunpack.c.l.b16 %v1278
        %v1313 = vunpack.c.h.b16 %v1278
        %v1314 = vunpack.c.l.b16 %v1279
        %v1315 = vunpack.c.h.b16 %v1279
        %v1316 = vunpack.c.l.b16 %v1280
        %v1317 = vunpack.c.h.b16 %v1280
        %v1318 = vunpack.c.l.b16 %v1281
        %v1319 = vunpack.c.h.b16 %v1281
        %v1320 = vunpack.c.l.b16 %v1282
        %v1321 = vunpack.c.h.b16 %v1282
        %v1322 = vunpack.c.l.b16 %v1283
        %v1323 = vunpack.c.h.b16 %v1283
        %v1324 = vunpack.c.l.b16 %v1284
        %v1325 = vunpack.c.h.b16 %v1284
        %v1326 = vunpack.c.l.b16 %v1285
        %v1327 = vunpack.c.h.b16 %v1285
        %v1328 = vunpack.c.l.b16 %v1286
        %v1329 = vunpack.c.h.b16 %v1286
        %v1330 = vunpack.c.l.b16 %v1287
        %v1331 = vunpack.c.h.b16 %v1287
        %v1332 = vunpack.c.l.b16 %v1288
        %v1333 = vunpack.c.h.b16 %v1288
        %v1334 = vunpack.c.l.b16 %v1289
        %v1335 = vunpack.c.h.b16 %v1289
        %v1336 = vunpack.c.l.b16 %v1290
        %v1337 = vunpack.c.h.b16 %v1290
        %v1338 = vunpack.c.l.b16 %v1291
        %v1339 = vunpack.c.h.b16 %v1291
        %v1340 = vpack.c.b16 %v1308, %v1308
        %v1341 = vpack.c.b16 %v1309, %v1309
        %v1342 = vpack.c.b16 %v1310, %v1310
        %v1343 = vpack.c.b16 %v1311, %v1311
        %v1344 = vpack.c.b16 %v1312, %v1312
        %v1345 = vpack.c.b16 %v1313, %v1313
        %v1346 = vpack.c.b16 %v1314, %v1314
        %v1347 = vpack.c.b16 %v1315, %v1315
        %v1348 = vpack.c.b16 %v1316, %v1316
        %v1349 = vpack.c.b16 %v1317, %v1317
        %v1350 = vpack.c.b16 %v1318, %v1318
        %v1351 = vpack.c.b16 %v1319, %v1319
        %v1352 = vpack.c.b16 %v1320, %v1320
        %v1353 = vpack.c.b16 %v1321, %v1321
        %v1354 = vpack.c.b16 %v1322, %v1322
        %v1355 = vpack.c.b16 %v1323, %v1323
        %v1356 = vpack.c.b16 %v1324, %v1324
        %v1357 = vpack.c.b16 %v1325, %v1325
        %v1358 = vpack.c.b16 %v1326, %v1326
        %v1359 = vpack.c.b16 %v1327, %v1327
        %v1360 = vpack.c.b16 %v1328, %v1328
        %v1361 = vpack.c.b16 %v1329, %v1329
        %v1362 = vpack.c.b16 %v1330, %v1330
        %v1363 = vpack.c.b16 %v1331, %v1331
        %v1364 = vpack.c.b16 %v1332, %v1332
        %v1365 = vpack.c.b16 %v1333, %v1333
        %v1366 = vpack.c.b16 %v1334, %v1334
        %v1367 = vpack.c.b16 %v1335, %v1335
        %v1368 = vpack.c.b16 %v1336, %v1336
        %v1369 = vpack.c.b16 %v1337, %v1337
        %v1370 = vpack.c.b16 %v1338, %v1338
        %v1371 = vpack.c.b16 %v1339, %v1339
        %1404 = vst [vmem:[%s302] sm:$0xf] %v1340
        %1405 = vst [vmem:[%s302 + $0x4] sm:$0xf] %v1341
        %1406 = vst [vmem:[%s302 + $0x8] sm:$0xf] %v1342
        %1407 = vst [vmem:[%s302 + $0xc] sm:$0xf] %v1343
        %1408 = vst [vmem:[%s302 + $0x10] sm:$0xf] %v1344
        %1409 = vst [vmem:[%s302 + $0x14] sm:$0xf] %v1345
        %1410 = vst [vmem:[%s302 + $0x18] sm:$0xf] %v1346
        %1411 = vst [vmem:[%s302 + $0x1c] sm:$0xf] %v1347
        %1412 = vst [vmem:[%s302 + $0x20] sm:$0xf] %v1348
        %1413 = vst [vmem:[%s302 + $0x24] sm:$0xf] %v1349
        %1414 = vst [vmem:[%s302 + $0x28] sm:$0xf] %v1350
        %1415 = vst [vmem:[%s302 + $0x2c] sm:$0xf] %v1351
        %1416 = vst [vmem:[%s302 + $0x30] sm:$0xf] %v1352
        %1417 = vst [vmem:[%s302 + $0x34] sm:$0xf] %v1353
        %1418 = vst [vmem:[%s302 + $0x38] sm:$0xf] %v1354
        %1419 = vst [vmem:[%s302 + $0x3c] sm:$0xf] %v1355
        %1420 = vst [vmem:[%s302 + $0x40] sm:$0xf] %v1356
        %1421 = vst [vmem:[%s302 + $0x44] sm:$0xf] %v1357
        %1422 = vst [vmem:[%s302 + $0x48] sm:$0xf] %v1358
        %1423 = vst [vmem:[%s302 + $0x4c] sm:$0xf] %v1359
        %1424 = vst [vmem:[%s302 + $0x50] sm:$0xf] %v1360
        %1425 = vst [vmem:[%s302 + $0x54] sm:$0xf] %v1361
        %1426 = vst [vmem:[%s302 + $0x58] sm:$0xf] %v1362
        %1427 = vst [vmem:[%s302 + $0x5c] sm:$0xf] %v1363
        %1428 = vst [vmem:[%s302 + $0x60] sm:$0xf] %v1364
        %1429 = vst [vmem:[%s302 + $0x64] sm:$0xf] %v1365
        %1430 = vst [vmem:[%s302 + $0x68] sm:$0xf] %v1366
        %1431 = vst [vmem:[%s302 + $0x6c] sm:$0xf] %v1367
        %1432 = vst [vmem:[%s302 + $0x70] sm:$0xf] %v1368
        %1433 = vst [vmem:[%s302 + $0x74] sm:$0xf] %v1369
        %1434 = vst [vmem:[%s302 + $0x78] sm:$0xf] %v1370
        %1435 = vst [vmem:[%s302 + $0x7c] sm:$0xf] %v1371
        %s1436 = sand.u32 %s150, 1
        %s1437 = scalar_lea.sflag [#allocation4], %s1436
        %s1438 = sand.u32 %s150, 1
        %s1439 = smul.addr %s1438, 128
        %s1440 = scalar_lea.vmem [#allocation8], %s1439
        // Predicated region
        $region49: #{tpu_custom_call.1} parent=35 // pred_check
          %p1441 = pneg %p160
        $region50: #{tpu_custom_call.1} parent=35 // pred_check_branch
          %1443 = sbr.rel (%p1441) target = $region52
        $region51: #{tpu_custom_call.1} parent=35 // pred_region
          %s1445 = ssub.s32 2048, 2048
          %1446 = vsyncadd %s1437, %s1445
          %s1447 = smul.addr %s26, 32
          %s1448 = sadd.s32 %s27, %s1447
          %s1449 = smul.addr %s1448, 64
          %s1450 = scalar_lea.hbm %s4, %s1449
          %s1451 = sshll.u32 %s1440, 4
          %s1452 = int_to_ptr.vmem [resolvable:$true] %s1451
          %1457 = dma.vmem_to_hbm [thread:$0]  %s1452, 2048, %s1450, %s1437, 64, 64, 4
        $region52: #{tpu_custom_call.1} parent=35 // pred_fallthru
          _
      $region36: #{tpu_custom_call.1} parent=5 // pred_fallthru
        _
      %p1458 = scmp.le.s32.totalorder 2, %s17
      // Predicated region
      $region53: #{tpu_custom_call.1} parent=5 // pred_check
        %p1459 = pneg %p1458
      $region54: #{tpu_custom_call.1} parent=5 // pred_check_branch
        %1461 = sbr.rel (%p1459) target = $region56
      $region55: #{tpu_custom_call.1} parent=5 // pred_region
        %s1462 = ssub.s32 %s17, 2
        // Predicated region
        $region57: #{tpu_custom_call.1} parent=55 // pred_check
          %p1463 = pneg %p166
        $region58: #{tpu_custom_call.1} parent=55 // pred_check_branch
          %1465 = sbr.rel (%p1463) target = $region60
        $region59: #{tpu_custom_call.1} parent=55 // pred_region
          %s1466 = sand.u32 %s151, 1
          %s1467 = scalar_lea.sflag [#allocation4], %s1466
          %s1468 = sand.u32 %s151, 1
          %s1469 = smul.addr %s1468, 128
          %s1470 = scalar_lea.vmem [#allocation8], %s1469
          %1471 = dma.done %s1467, 2048
        $region60: #{tpu_custom_call.1} parent=55 // pred_fallthru
          _
      $region56: #{tpu_custom_call.1} parent=5 // pred_fallthru
        _
    $region6: #{tpu_custom_call.1} parent=1 // loop_footer
      %s21 = sadd.s32 1, %s17
    $region7: #{tpu_custom_call.1} parent=1 // loop_footer_branch
      %16 = sbr.rel target = $region3
    $region8: #{tpu_custom_call.1} parent=1 // loop_exit
      _
    %1472 = vsyncpa [#allocation3], 1
    %s1473 = scalar_lea.sflag [#allocation3], 1
    %1474 = vsyncpa %s1473, 1
    %1475 = vsyncpa [#allocation6], 1
    %1476 = vsyncpa [#allocation4], 1
    %s1477 = scalar_lea.sflag [#allocation4], 1
    %1478 = vsyncpa %s1477, 1

</llo_original>
